<compile_context>
chip_gen: v5e
topology: v5e:2x2
jax: 0.10.0
libtpu: 0.0.40
codegen_flags: <defaults>
</compile_context>

<pallas_src>
import jax
import jax.numpy as jnp
from jax.experimental import pallas as pl
from jax.experimental.pallas import tpu as pltpu

LANE = 128
SUBLANE = 8
_MIB = 1024 * 1024


# ---------------------------------------------------------------------------
# small helpers
# ---------------------------------------------------------------------------
def _round_up(x, m):
    return ((x + m - 1) // m) * m


def _vmem_capacity_bytes():
    """Best-effort VMEM capacity query; conservative 64 MiB (v7x) fallback."""
    try:
        return int(pltpu.get_tpu_info().vmem_capacity_bytes)
    except Exception:
        return 64 * _MIB


def _probe_buffered():
    """Does this jax version support pipeline_mode=pl.Buffered(...) on BlockSpec?"""
    if not hasattr(pl, "Buffered"):
        return False
    try:
        pl.BlockSpec((8, 128), lambda i: (i, 0), pipeline_mode=pl.Buffered(1))
        return True
    except Exception:
        return False


_HAS_BUFFERED = _probe_buffered()


def _vmem_limit(need_bytes, vmem_cap):
    limit = int(need_bytes * 1.2) + 2 * _MIB        # headroom for compiler scratch
    limit = max(limit, 16 * _MIB)
    return min(limit, vmem_cap)


def _pick_tile_b(B, tile_b, vmem_cap):
    if tile_b is None:
        # 128 MiB VMEM parts (v5e/v6e): 512-row tiles amortize the ~0.35us/step
        # overhead (~85% of HBM roofline vs ~63% at 256).  64 MiB parts (v7x): 256.
        tile_b = 512 if vmem_cap >= 100 * _MIB else 256
    if B <= tile_b:
        return _round_up(max(B, 1), SUBLANE)        # one grid step for small batches
    return tile_b


def _pad_x(x, B_p, in_p, compute_dtype):
    """Fused pad+cast of the activation; skipped when already aligned & typed."""
    B, in_sz = x.shape
    cd = compute_dtype if compute_dtype is not None else x.dtype
    if B == B_p and in_sz == in_p:
        return x if x.dtype == cd else x.astype(cd)
    return jnp.zeros((B_p, in_p), cd).at[:B, :in_sz].set(x.astype(cd))


# ---------------------------------------------------------------------------
# parameter preparation (call ONCE at init, not per forward)
# ---------------------------------------------------------------------------
def prepare_params(w1, b1, w2, b2, *, compute_dtype=None):
    """Pad (and optionally cast) single-member weights to lane-dense layouts once.

    w1: (in, hid), b1: (hid,) or (1, hid), w2: (hid, out), b2: (out,) or (1, out).
    Zero padding is mathematically exact (padded inputs hit zero weights, padded
    hidden units have zero weight+bias so relu(0)=0 contributes nothing, padded
    output columns are sliced off).
    """
    in_sz, hid = w1.shape
    out_sz = w2.shape[1]
    in_p, hid_p, out_p = (_round_up(d, LANE) for d in (in_sz, hid, out_sz))
    wdt = compute_dtype if compute_dtype is not None else w1.dtype

    w1p = jnp.zeros((in_p, hid_p), wdt).at[:in_sz, :hid].set(w1.astype(wdt))
    w2p = jnp.zeros((hid_p, out_p), wdt).at[:hid, :out_sz].set(w2.astype(wdt))
    # Biases stay f32: they are added to f32 accumulators (keeps bias/ReLU math
    # f32 even with bf16 weights -- v5e's VPU has no bf16 path).
    b1p = jnp.zeros((1, hid_p), jnp.float32).at[0, :hid].set(
        b1.reshape(-1).astype(jnp.float32))
    b2p = jnp.zeros((1, out_p), jnp.float32).at[0, :out_sz].set(
        b2.reshape(-1).astype(jnp.float32))
    return dict(w1=w1p, b1=b1p, w2=w2p, b2=b2p,
                in_size=in_sz, hidden_size=hid, out_size=out_sz,
                compute_dtype=compute_dtype)


def prepare_params_ensemble(w1, b1, w2, b2, *, compute_dtype=None):
    """Pad/cast ensemble weights once.  w1: (E,in,hid), b1: (E,hid)|(E,1,hid),
    w2: (E,hid,out), b2: (E,out)|(E,1,out)."""
    E, in_sz, hid = w1.shape
    out_sz = w2.shape[2]
    in_p, hid_p, out_p = (_round_up(d, LANE) for d in (in_sz, hid, out_sz))
    wdt = compute_dtype if compute_dtype is not None else w1.dtype

    w1p = jnp.zeros((E, in_p, hid_p), wdt).at[:, :in_sz, :hid].set(w1.astype(wdt))
    w2p = jnp.zeros((E, hid_p, out_p), wdt).at[:, :hid, :out_sz].set(w2.astype(wdt))
    b1p = jnp.zeros((E, 1, hid_p), jnp.float32).at[:, 0, :hid].set(
        b1.reshape(E, hid).astype(jnp.float32))
    b2p = jnp.zeros((E, 1, out_p), jnp.float32).at[:, 0, :out_sz].set(
        b2.reshape(E, out_sz).astype(jnp.float32))
    return dict(w1=w1p, b1=b1p, w2=w2p, b2=b2p,
                in_size=in_sz, hidden_size=hid, out_size=out_sz,
                compute_dtype=compute_dtype)


# ---------------------------------------------------------------------------
# kernels
# ---------------------------------------------------------------------------
def _mlp_kernel(x_ref, w1_ref, b1_ref, w2_ref, b2_ref, o_ref):
    # fc1 + ReLU (dropout_rate == 0.0 in the reference module -> exact identity).
    # TODO(synk): nonzero dropout (training) would need pltpu.prng_seed/prng_random_bits.
    h = jnp.dot(x_ref[...], w1_ref[...], preferred_element_type=jnp.float32)
    h = jnp.maximum(h + b1_ref[...], 0.0)
    # NOTE: with compute_dtype=bf16 the f32 intermediate is rounded to bf16 before
    # the second MXU matmul (throughput trade-off); accumulation stays f32.
    out = jnp.dot(h.astype(w2_ref.dtype), w2_ref[...],
                  preferred_element_type=jnp.float32)
    o_ref[...] = (out + b2_ref[...]).astype(o_ref.dtype)


def _mlp_kernel_hidden_tiled(x_ref, w1_ref, b1_ref, w2_ref, b2_ref, o_ref, acc_ref):
    # Hidden dim streamed as the trailing ("arbitrary") grid axis; f32 accumulator.
    k = pl.program_id(1)

    @pl.when(k == 0)
    def _():
        acc_ref[...] = jnp.zeros_like(acc_ref)

    h = jnp.dot(x_ref[...], w1_ref[...], preferred_element_type=jnp.float32)
    h = jnp.maximum(h + b1_ref[...], 0.0)
    acc_ref[...] += jnp.dot(h.astype(w2_ref.dtype), w2_ref[...],
                            preferred_element_type=jnp.float32)

    @pl.when(k == pl.num_programs(1) - 1)
    def _():
        o_ref[...] = (acc_ref[...] + b2_ref[...]).astype(o_ref.dtype)


# ---------------------------------------------------------------------------
# single-member forward
# ---------------------------------------------------------------------------
def _call_single_resident(xp, w1p, b1p, w2p, b2p, out_dtype,
                          B_p, tb, in_p, hid_p, out_p,
                          vmem_limit, use_single_buffer):
    def wspec(shape, imap):
        # Constant-index blocks: single-buffer them (no point double-buffering a
        # block whose index never changes) to halve their VMEM footprint.
        if use_single_buffer:
            return pl.BlockSpec(shape, imap, pipeline_mode=pl.Buffered(1))
        return pl.BlockSpec(shape, imap)

    return pl.pallas_call(
        _mlp_kernel,
        out_shape=jax.ShapeDtypeStruct((B_p, out_p), out_dtype),
        grid_spec=pltpu.PrefetchScalarGridSpec(
            num_scalar_prefetch=0,
            grid=(B_p // tb,),
            in_specs=[
                pl.BlockSpec((tb, in_p), lambda i: (i, 0)),       # x tile (streams)
                wspec((in_p, hid_p), lambda i: (0, 0)),           # w1 (resident)
                wspec((1, hid_p), lambda i: (0, 0)),              # b1
                wspec((hid_p, out_p), lambda i: (0, 0)),          # w2 (resident)
                wspec((1, out_p), lambda i: (0, 0)),              # b2
            ],
            out_specs=pl.BlockSpec((tb, out_p), lambda i: (i, 0)),  # lane-dense store
        ),
        compiler_params=pltpu.CompilerParams(
            dimension_semantics=("parallel",),
            vmem_limit_bytes=vmem_limit),
    )(xp, w1p, b1p, w2p, b2p)


def _call_single_hidden_tiled(xp, w1p, b1p, w2p, b2p, out_dtype,
                              B_p, tb, in_p, hid_p, out_p, th, vmem_limit):
    return pl.pallas_call(
        _mlp_kernel_hidden_tiled,
        out_shape=jax.ShapeDtypeStruct((B_p, out_p), out_dtype),
        grid_spec=pltpu.PrefetchScalarGridSpec(
            num_scalar_prefetch=0,
            grid=(B_p // tb, hid_p // th),
            in_specs=[
                pl.BlockSpec((tb, in_p), lambda i, k: (i, 0)),    # x (resident over k)
                pl.BlockSpec((in_p, th), lambda i, k: (0, k)),    # w1 hidden-tile
                pl.BlockSpec((1, th), lambda i, k: (0, k)),       # b1 hidden-tile
                pl.BlockSpec((th, out_p), lambda i, k: (k, 0)),   # w2 hidden-tile
                pl.BlockSpec((1, out_p), lambda i, k: (0, 0)),    # b2
            ],
            out_specs=pl.BlockSpec((tb, out_p), lambda i, k: (i, 0)),
            scratch_shapes=[pltpu.VMEM((tb, out_p), jnp.float32)],
        ),
        compiler_params=pltpu.CompilerParams(
            dimension_semantics=("parallel", "arbitrary"),
            vmem_limit_bytes=vmem_limit),
    )(xp, w1p, b1p, w2p, b2p)


def ensemblenn_forward(x, params, *, tile_b=None, force_hidden_tiling=False):
    """y = fc2(relu(fc1(x))) for one member.  `params` from prepare_params()."""
    w1p, b1p, w2p, b2p = params["w1"], params["b1"], params["w2"], params["b2"]
    in_sz, out_sz = params["in_size"], params["out_size"]
    in_p, hid_p = w1p.shape
    out_p = w2p.shape[1]
    B = x.shape[0]

    vmem_cap = _vmem_capacity_bytes()
    tb = _pick_tile_b(B, tile_b, vmem_cap)
    B_p = _round_up(B, tb)

    xp = _pad_x(x, B_p, in_p, params["compute_dtype"])

    xbytes = jnp.dtype(xp.dtype).itemsize
    wbytes = jnp.dtype(w1p.dtype).itemsize
    obytes = jnp.dtype(x.dtype).itemsize
    budget = int(0.8 * vmem_cap)

    # streaming tiles (double-buffered) + f32 intermediates
    stream = (2 * tb * in_p * xbytes + 2 * tb * out_p * obytes
              + tb * hid_p * 4 + tb * out_p * 4)
    resident_w = (in_p * hid_p + hid_p * out_p) * wbytes + (hid_p + out_p) * 4
    w_buf = 1 if _HAS_BUFFERED else 2

    if not force_hidden_tiling and (w_buf * resident_w + stream) <= budget:
        def attempt(use_buf):
            mult = 1 if use_buf else 2
            lim = _vmem_limit(mult * resident_w + stream, vmem_cap)
            return _call_single_resident(xp, w1p, b1p, w2p, b2p, x.dtype,
                                         B_p, tb, in_p, hid_p, out_p,
                                         lim, use_buf)
        if _HAS_BUFFERED:
            try:
                out = attempt(True)
            except Exception:
                out = attempt(False)
        else:
            out = attempt(False)
    else:
        # Hidden-dim tiling fallback: stream w1/w2 over the hidden dim so large
        # hidden sizes still fit (esp. v7x's 64 MiB VMEM).
        def hidden_fits(th):
            need = (2 * tb * in_p * xbytes
                    + 2 * (in_p * th * wbytes + th * 4)     # w1 + b1 tiles
                    + 2 * th * out_p * wbytes                # w2 tiles
                    + out_p * 4                              # b2
                    + 2 * tb * out_p * obytes                # out tiles
                    + tb * out_p * 4                         # acc scratch
                    + tb * th * 4)                           # h intermediate
            return need <= budget

        n = hid_p // LANE
        th = LANE
        for k in range(1, n + 1):
            if n % k:
                continue
            cand = hid_p // k                                # multiple of 128, divides hid_p
            if hidden_fits(cand):
                th = cand
                break
        need = (2 * tb * in_p * xbytes + 2 * (in_p * th * wbytes + th * 4)
                + 2 * th * out_p * wbytes + out_p * 4
                + 2 * tb * out_p * obytes + tb * out_p * 4 + tb * th * 4)
        out = _call_single_hidden_tiled(xp, w1p, b1p, w2p, b2p, x.dtype,
                                        B_p, tb, in_p, hid_p, out_p, th,
                                        _vmem_limit(need, vmem_cap))
    return out[:B, :out_sz]


# ---------------------------------------------------------------------------
# ensemble forward (E members fused into one pallas_call, shared input x)
# ---------------------------------------------------------------------------
def ensemblenn_forward_ensemble(x, params, *, tile_b=None):
    """Returns (E, batch, out).  `params` from prepare_params_ensemble()."""
    w1p, b1p, w2p, b2p = params["w1"], params["b1"], params["w2"], params["b2"]
    in_sz, out_sz = params["in_size"], params["out_size"]
    E, in_p, hid_p = w1p.shape
    out_p = w2p.shape[2]
    B = x.shape[0]

    vmem_cap = _vmem_capacity_bytes()
    tb = _pick_tile_b(B, tile_b, vmem_cap)
    B_p = _round_up(B, tb)
    n_b = B_p // tb

    xp = _pad_x(x, B_p, in_p, params["compute_dtype"])

    xbytes = jnp.dtype(xp.dtype).itemsize
    wbytes = jnp.dtype(w1p.dtype).itemsize
    obytes = jnp.dtype(x.dtype).itemsize

    per_member_w = (in_p * hid_p + hid_p * out_p) * wbytes + (hid_p + out_p) * 4
    x_bytes_total = B_p * in_p * xbytes

    # Data-size-aware grid order (memory-bound regime):
    #   member-outer: weights resident per member, x re-streamed E times;
    #   batch-outer : x tile resident, weights re-streamed n_b times.
    member_outer = (E - 1) * x_bytes_total <= (n_b - 1) * E * per_member_w

    need = (2 * per_member_w + 2 * tb * in_p * xbytes + 2 * tb * out_p * obytes
            + tb * hid_p * 4 + tb * out_p * 4)
    vmem_limit = _vmem_limit(need, vmem_cap)
    # TODO(synk): hidden-dim tiling fallback for the ensemble path (very large hidden
    # sizes); single-member path already supports it.
    # NOTE(v7x megacore): keep the sharded axis extent even/>=2 (pad E to even or
    # ensure n_b >= 2) so both TensorCores get work.

    if member_outer:
        grid = (E, n_b)
        x_spec = pl.BlockSpec((tb, in_p), lambda e, i: (i, 0))
        w1_spec = pl.BlockSpec((None, in_p, hid_p), lambda e, i: (e, 0, 0))
        b1_spec = pl.BlockSpec((None, 1, hid_p), lambda e, i: (e, 0, 0))
        w2_spec = pl.BlockSpec((None, hid_p, out_p), lambda e, i: (e, 0, 0))
        b2_spec = pl.BlockSpec((None, 1, out_p), lambda e, i: (e, 0, 0))
        o_spec = pl.BlockSpec((None, tb, out_p), lambda e, i: (e, i, 0))
    else:
        grid = (n_b, E)
        x_spec = pl.BlockSpec((tb, in_p), lambda i, e: (i, 0))
        w1_spec = pl.BlockSpec((None, in_p, hid_p), lambda i, e: (e, 0, 0))
        b1_spec = pl.BlockSpec((None, 1, hid_p), lambda i, e: (e, 0, 0))
        w2_spec = pl.BlockSpec((None, hid_p, out_p), lambda i, e: (e, 0, 0))
        b2_spec = pl.BlockSpec((None, 1, out_p), lambda i, e: (e, 0, 0))
        o_spec = pl.BlockSpec((None, tb, out_p), lambda i, e: (e, i, 0))

    out = pl.pallas_call(
        _mlp_kernel,
        out_shape=jax.ShapeDtypeStruct((E, B_p, out_p), x.dtype),
        grid_spec=pltpu.PrefetchScalarGridSpec(
            num_scalar_prefetch=0,
            grid=grid,
            in_specs=[x_spec, w1_spec, b1_spec, w2_spec, b2_spec],
            out_specs=o_spec,
        ),
        compiler_params=pltpu.CompilerParams(
            dimension_semantics=("parallel", "parallel"),
            vmem_limit_bytes=vmem_limit),
    )(xp, w1p, b1p, w2p, b2p)
    return out[:, :B, :out_sz]


# ---------------------------------------------------------------------------
# init + demo
# ---------------------------------------------------------------------------
def init_params(key, input_size, hidden_size, output_size, dtype=jnp.float32):
    # Deterministic init mimicking nn.Linear's uniform(-1/sqrt(fan_in), 1/sqrt(fan_in)).
    k1, k2, k3, k4 = jax.random.split(key, 4)
    lim1 = 1.0 / jnp.sqrt(jnp.array(input_size, dtype))
    lim2 = 1.0 / jnp.sqrt(jnp.array(hidden_size, dtype))
    w1 = jax.random.uniform(k1, (input_size, hidden_size), dtype, -lim1, lim1)
    b1 = jax.random.uniform(k2, (1, hidden_size), dtype, -lim1, lim1)
    w2 = jax.random.uniform(k3, (hidden_size, output_size), dtype, -lim2, lim2)
    b2 = jax.random.uniform(k4, (1, output_size), dtype, -lim2, lim2)
    return w1, b1, w2, b2


if __name__ == "__main__":
    input_size, hidden_size, output_size = 32, 64, 16
    batch, n_members = 16, 4

    key = jax.random.PRNGKey(0)
    kx, kp, ke = jax.random.split(key, 3)
    x = jax.random.normal(kx, (batch, input_size), jnp.float32)

    # --- single member (weights padded ONCE at init) ---
    w1, b1, w2, b2 = init_params(kp, input_size, hidden_size, output_size)
    params = prepare_params(w1, b1, w2, b2)
    out = jax.block_until_ready(ensemblenn_forward(x, params))
    ref = jnp.maximum(x @ w1 + b1, 0.0) @ w2 + b2
    assert out.shape == (batch, output_size)
    assert jnp.allclose(out, ref, atol=1e-5, rtol=1e-5)

    # Exercise the hidden-dim-tiled fallback path as well.
    out_t = jax.block_until_ready(
        ensemblenn_forward(x, params, force_hidden_tiling=True))
    assert jnp.allclose(out_t, ref, atol=1e-5, rtol=1e-5)

    # --- E members fused into one call ---
    keys = jax.random.split(ke, n_members)
    w1s, b1s, w2s, b2s = jax.vmap(
        lambda k: init_params(k, input_size, hidden_size, output_size))(keys)
    eparams = prepare_params_ensemble(w1s, b1s, w2s, b2s)
    out_e = jax.block_until_ready(ensemblenn_forward_ensemble(x, eparams))
    h_e = jnp.maximum(jnp.einsum('bi,eih->ebh', x, w1s)
                      + b1s.reshape(n_members, 1, hidden_size), 0.0)
    ref_e = jnp.einsum('ebh,eho->ebo', h_e, w2s) + b2s.reshape(n_members, 1, output_size)
    assert out_e.shape == (n_members, batch, output_size)
    assert jnp.allclose(out_e, ref_e, atol=1e-5, rtol=1e-5)

    print("KERNEL_OK")
</pallas_src>

<mosaic_0001>
module attributes {stable_mosaic.version = 11 : i64} {
  func.func @_mlp_kernel(%arg0: i32, %arg1: memref<16x128xf32, #tpu.memory_space<vmem>>, %arg2: memref<128x128xf32, #tpu.memory_space<vmem>>, %arg3: memref<1x128xf32, #tpu.memory_space<vmem>>, %arg4: memref<128x128xf32, #tpu.memory_space<vmem>>, %arg5: memref<1x128xf32, #tpu.memory_space<vmem>>, %arg6: memref<16x128xf32, #tpu.memory_space<vmem>>) attributes {dimension_semantics = [#tpu.dimension_semantics<parallel>], iteration_bounds = array<i64: 1>, scalar_prefetch = 0 : i64, scratch_operands = 0 : i64, tpu.core_type = #tpu.core_type<tc>, window_params = [{transform_indices = @transform_0, window_bounds = array<i64: 16, 128>}, {pipeline_mode = #tpu.pipeline_mode<synchronous>, transform_indices = @transform_1, window_bounds = array<i64: 128, 128>}, {pipeline_mode = #tpu.pipeline_mode<synchronous>, transform_indices = @transform_2, window_bounds = array<i64: 1, 128>}, {pipeline_mode = #tpu.pipeline_mode<synchronous>, transform_indices = @transform_3, window_bounds = array<i64: 128, 128>}, {pipeline_mode = #tpu.pipeline_mode<synchronous>, transform_indices = @transform_4, window_bounds = array<i64: 1, 128>}, {transform_indices = @transform_5, window_bounds = array<i64: 16, 128>}]} {
    %c0 = arith.constant 0 : index
    %c0_0 = arith.constant 0 : index
    %0 = vector.load %arg1[%c0, %c0_0] : memref<16x128xf32, #tpu.memory_space<vmem>>, vector<16x128xf32>
    %c0_1 = arith.constant 0 : index
    %c0_2 = arith.constant 0 : index
    %1 = vector.load %arg2[%c0_1, %c0_2] : memref<128x128xf32, #tpu.memory_space<vmem>>, vector<128x128xf32>
    %cst = arith.constant dense<0.000000e+00> : vector<16x128xf32>
    %2 = tpu.matmul %0, %1, %cst {dimension_numbers = #tpu.dot_dimension_numbers<[1], [0], [0], [1], [0, 0, 1, 1], [], []>} : vector<16x128xf32>, vector<128x128xf32>, vector<16x128xf32> -> vector<16x128xf32>
    %c0_3 = arith.constant 0 : index
    %c0_4 = arith.constant 0 : index
    %3 = vector.load %arg3[%c0_3, %c0_4] : memref<1x128xf32, #tpu.memory_space<vmem>>, vector<1x128xf32>
    %4 = vector.broadcast %3 : vector<1x128xf32> to vector<16x128xf32>
    %5 = arith.addf %2, %4 : vector<16x128xf32>
    %cst_5 = arith.constant 0.000000e+00 : f32
    %6 = vector.broadcast %cst_5 : f32 to vector<16x128xf32>
    %7 = arith.maximumf %5, %6 : vector<16x128xf32>
    %c0_6 = arith.constant 0 : index
    %c0_7 = arith.constant 0 : index
    %8 = vector.load %arg4[%c0_6, %c0_7] : memref<128x128xf32, #tpu.memory_space<vmem>>, vector<128x128xf32>
    %cst_8 = arith.constant dense<0.000000e+00> : vector<16x128xf32>
    %9 = tpu.matmul %7, %8, %cst_8 {dimension_numbers = #tpu.dot_dimension_numbers<[1], [0], [0], [1], [0, 0, 1, 1], [], []>} : vector<16x128xf32>, vector<128x128xf32>, vector<16x128xf32> -> vector<16x128xf32>
    %c0_9 = arith.constant 0 : index
    %c0_10 = arith.constant 0 : index
    %10 = vector.load %arg5[%c0_9, %c0_10] : memref<1x128xf32, #tpu.memory_space<vmem>>, vector<1x128xf32>
    %11 = vector.broadcast %10 : vector<1x128xf32> to vector<16x128xf32>
    %12 = arith.addf %9, %11 : vector<16x128xf32>
    %c0_11 = arith.constant 0 : index
    %c0_12 = arith.constant 0 : index
    %13 = vector.load %arg6[%c0_11, %c0_12] : memref<16x128xf32, #tpu.memory_space<vmem>>, vector<16x128xf32>
    tpu.vector_store %arg6[%c0_11, %c0_12], %12 {strides = array<i32>} : memref<16x128xf32, #tpu.memory_space<vmem>>, vector<16x128xf32>,
    return
  }
  func.func @transform_0(%arg0: i32) -> (i32, i32) {
    %c0_i32 = arith.constant 0 : i32
    %c0_i32_0 = arith.constant 0 : i32
    return %arg0, %c0_i32 : i32, i32
  }
  func.func @transform_1(%arg0: i32) -> (i32, i32) {
    %c0_i32 = arith.constant 0 : i32
    %c0_i32_0 = arith.constant 0 : i32
    %c0_i32_1 = arith.constant 0 : i32
    return %c0_i32, %c0_i32_0 : i32, i32
  }
  func.func @transform_2(%arg0: i32) -> (i32, i32) {
    %c0_i32 = arith.constant 0 : i32
    %c0_i32_0 = arith.constant 0 : i32
    %c0_i32_1 = arith.constant 0 : i32
    return %c0_i32, %c0_i32_0 : i32, i32
  }
  func.func @transform_3(%arg0: i32) -> (i32, i32) {
    %c0_i32 = arith.constant 0 : i32
    %c0_i32_0 = arith.constant 0 : i32
    %c0_i32_1 = arith.constant 0 : i32
    return %c0_i32, %c0_i32_0 : i32, i32
  }
  func.func @transform_4(%arg0: i32) -> (i32, i32) {
    %c0_i32 = arith.constant 0 : i32
    %c0_i32_0 = arith.constant 0 : i32
    %c0_i32_1 = arith.constant 0 : i32
    return %c0_i32, %c0_i32_0 : i32, i32
  }
  func.func @transform_5(%arg0: i32) -> (i32, i32) {
    %c0_i32 = arith.constant 0 : i32
    %c0_i32_0 = arith.constant 0 : i32
    return %arg0, %c0_i32 : i32, i32
  }
}

module attributes {stable_mosaic.version = 11 : i64} {
  func.func @_mlp_kernel(%arg0: i32, %arg1: memref<16x128xf32, #tpu.memory_space<vmem>>, %arg2: memref<128x128xf32, #tpu.memory_space<vmem>>, %arg3: memref<1x128xf32, #tpu.memory_space<vmem>>, %arg4: memref<128x128xf32, #tpu.memory_space<vmem>>, %arg5: memref<1x128xf32, #tpu.memory_space<vmem>>, %arg6: memref<16x128xf32, #tpu.memory_space<vmem>>) attributes {dimension_semantics = [#tpu.dimension_semantics<parallel>], iteration_bounds = array<i64: 1>, scalar_prefetch = 0 : i64, scratch_operands = 0 : i64, tpu.core_type = #tpu.core_type<tc>, window_params = [{transform_indices = @transform_0, window_bounds = array<i64: 16, 128>}, {pipeline_mode = #tpu.pipeline_mode<synchronous>, transform_indices = @transform_1, window_bounds = array<i64: 128, 128>}, {pipeline_mode = #tpu.pipeline_mode<synchronous>, transform_indices = @transform_2, window_bounds = array<i64: 1, 128>}, {pipeline_mode = #tpu.pipeline_mode<synchronous>, transform_indices = @transform_3, window_bounds = array<i64: 128, 128>}, {pipeline_mode = #tpu.pipeline_mode<synchronous>, transform_indices = @transform_4, window_bounds = array<i64: 1, 128>}, {transform_indices = @transform_5, window_bounds = array<i64: 16, 128>}]} {
    %c0 = arith.constant 0 : index
    %c0_0 = arith.constant 0 : index
    %0 = vector.load %arg1[%c0, %c0_0] : memref<16x128xf32, #tpu.memory_space<vmem>>, vector<16x128xf32>
    %c0_1 = arith.constant 0 : index
    %c0_2 = arith.constant 0 : index
    %1 = vector.load %arg2[%c0_1, %c0_2] : memref<128x128xf32, #tpu.memory_space<vmem>>, vector<128x128xf32>
    %cst = arith.constant dense<0.000000e+00> : vector<16x128xf32>
    %2 = tpu.matmul %0, %1, %cst {dimension_numbers = #tpu.dot_dimension_numbers<[1], [0], [0], [1], [0, 0, 1, 1], [], []>} : vector<16x128xf32>, vector<128x128xf32>, vector<16x128xf32> -> vector<16x128xf32>
    %c0_3 = arith.constant 0 : index
    %c0_4 = arith.constant 0 : index
    %3 = vector.load %arg3[%c0_3, %c0_4] : memref<1x128xf32, #tpu.memory_space<vmem>>, vector<1x128xf32>
    %4 = vector.broadcast %3 : vector<1x128xf32> to vector<16x128xf32>
    %5 = arith.addf %2, %4 : vector<16x128xf32>
    %cst_5 = arith.constant 0.000000e+00 : f32
    %6 = vector.broadcast %cst_5 : f32 to vector<16x128xf32>
    %7 = arith.maximumf %5, %6 : vector<16x128xf32>
    %c0_6 = arith.constant 0 : index
    %c0_7 = arith.constant 0 : index
    %8 = vector.load %arg4[%c0_6, %c0_7] : memref<128x128xf32, #tpu.memory_space<vmem>>, vector<128x128xf32>
    %cst_8 = arith.constant dense<0.000000e+00> : vector<16x128xf32>
    %9 = tpu.matmul %7, %8, %cst_8 {dimension_numbers = #tpu.dot_dimension_numbers<[1], [0], [0], [1], [0, 0, 1, 1], [], []>} : vector<16x128xf32>, vector<128x128xf32>, vector<16x128xf32> -> vector<16x128xf32>
    %c0_9 = arith.constant 0 : index
    %c0_10 = arith.constant 0 : index
    %10 = vector.load %arg5[%c0_9, %c0_10] : memref<1x128xf32, #tpu.memory_space<vmem>>, vector<1x128xf32>
    %11 = vector.broadcast %10 : vector<1x128xf32> to vector<16x128xf32>
    %12 = arith.addf %9, %11 : vector<16x128xf32>
    %c0_11 = arith.constant 0 : index
    %c0_12 = arith.constant 0 : index
    %13 = vector.load %arg6[%c0_11, %c0_12] : memref<16x128xf32, #tpu.memory_space<vmem>>, vector<16x128xf32>
    tpu.vector_store %arg6[%c0_11, %c0_12], %12 {strides = array<i32>} : memref<16x128xf32, #tpu.memory_space<vmem>>, vector<16x128xf32>,
    return
  }
  func.func @transform_0(%arg0: i32) -> (i32, i32) {
    %c0_i32 = arith.constant 0 : i32
    %c0_i32_0 = arith.constant 0 : i32
    return %arg0, %c0_i32 : i32, i32
  }
  func.func @transform_1(%arg0: i32) -> (i32, i32) {
    %c0_i32 = arith.constant 0 : i32
    %c0_i32_0 = arith.constant 0 : i32
    %c0_i32_1 = arith.constant 0 : i32
    return %c0_i32, %c0_i32_0 : i32, i32
  }
  func.func @transform_2(%arg0: i32) -> (i32, i32) {
    %c0_i32 = arith.constant 0 : i32
    %c0_i32_0 = arith.constant 0 : i32
    %c0_i32_1 = arith.constant 0 : i32
    return %c0_i32, %c0_i32_0 : i32, i32
  }
  func.func @transform_3(%arg0: i32) -> (i32, i32) {
    %c0_i32 = arith.constant 0 : i32
    %c0_i32_0 = arith.constant 0 : i32
    %c0_i32_1 = arith.constant 0 : i32
    return %c0_i32, %c0_i32_0 : i32, i32
  }
  func.func @transform_4(%arg0: i32) -> (i32, i32) {
    %c0_i32 = arith.constant 0 : i32
    %c0_i32_0 = arith.constant 0 : i32
    %c0_i32_1 = arith.constant 0 : i32
    return %c0_i32, %c0_i32_0 : i32, i32
  }
  func.func @transform_5(%arg0: i32) -> (i32, i32) {
    %c0_i32 = arith.constant 0 : i32
    %c0_i32_0 = arith.constant 0 : i32
    return %arg0, %c0_i32 : i32, i32
  }
}

</mosaic_0001>

<llo_original>
// kernel: tpu_custom_call.1
$region0: #{tpu_custom_call.1}
  #allocation0 [shape = 'u32[]', space=smem, size = 0x4, offset = 0x4, fixed_abs, tag = 'smem constant byte address 0x4 - core index']
  #allocation1 [shape = 'u32[72,128]{1,0:T(1,128)}', space=vmem, size = 0x9000, scoped, tag = 'internal scratch']
  %s0 = inlined_call_operand.hbm [shape: f32[16,128], index: 0, kind: input, shape index: {}]
  %s1 = inlined_call_operand.hbm [shape: f32[128,128], index: 1, kind: input, shape index: {}]
  %s2 = inlined_call_operand.vmem [shape: f32[1,128], index: 2, kind: input, shape index: {}]
  %s3 = inlined_call_operand.hbm [shape: f32[128,128], index: 3, kind: input, shape index: {}]
  %s4 = inlined_call_operand.vmem [shape: f32[1,128], index: 4, kind: input, shape index: {}]
  %s5 = inlined_call_operand.hbm [shape: f32[16,128], index: 5, kind: output, shape index: {}]
  %s6 = sld [smem:[#allocation0]]
  $region42: #{tpu_custom_call.1} parent=0
    _
  %s8 = ssub.s32 1, %s6
  %s9 = scalar_select 0, %s8, %s6
  $region1: #{tpu_custom_call.1} parent=0
    #allocation2 [shape = 'u8[8192]{0}', space=vmem, size = 0x2000, scoped, tag = 'input window, operand 0, single buffered']
    #allocation3 [shape = 's32[1]{0}', space=sflag, size = 0x4, scoped, tag = 'scoped memory for tpu_custom_call.1']
    #allocation4 [shape = 's32[1]{0}', space=sflag, size = 0x4, scoped, tag = 'scoped memory for tpu_custom_call.1']
    #allocation5 [shape = 'u8[65536]{0}', space=vmem, size = 0x10000, scoped, tag = 'input window, operand 1, single buffered']
    #allocation6 [shape = 's32[1]{0}', space=sflag, size = 0x4, scoped, tag = 'scoped memory for tpu_custom_call.1']
    #allocation7 [shape = 'u8[65536]{0}', space=vmem, size = 0x10000, scoped, tag = 'input window, operand 3, single buffered']
    #allocation8 [shape = 'u8[8192]{0}', space=vmem, size = 0x2000, scoped, tag = 'output window, operand 0, single buffered']
    %10 = vsyncpa [#allocation3], 0
    %11 = vsyncpa [#allocation6], 0
    %12 = vsyncpa [#allocation4], 0
    // Predicated region
    $region2: #{tpu_custom_call.1} parent=1 // pred_check
      _
    $region3: #{tpu_custom_call.1} parent=1 // pred_check_branch
      %14 = sbr.rel (0) target = $region5
    $region4: #{tpu_custom_call.1} parent=1 // pred_region
      %16 = vsyncadd [#allocation3], 0
      %s17 = sshll.u32 %s0, 4
      %s18 = int_to_ptr.hbm [resolvable:$true] %s17
      %s19 = sshll.u32 [#allocation2], 4
      %s20 = int_to_ptr.vmem [resolvable:$true] %s19
      %25 = dma.hbm_to_vmem [thread:$0]  %s18, 256, %s20, [#allocation3], 128, 128, 8
    $region5: #{tpu_custom_call.1} parent=1 // pred_fallthru
      _
    // Predicated region
    $region6: #{tpu_custom_call.1} parent=1 // pred_check
      _
    $region7: #{tpu_custom_call.1} parent=1 // pred_check_branch
      %27 = sbr.rel (0) target = $region9
    $region8: #{tpu_custom_call.1} parent=1 // pred_region
      %29 = vsyncadd [#allocation6], 0
      %s30 = sshll.u32 %s1, 4
      %s31 = int_to_ptr.hbm [resolvable:$true] %s30
      %s32 = sshll.u32 [#allocation5], 4
      %s33 = int_to_ptr.vmem [resolvable:$true] %s32
      %38 = dma.hbm_to_vmem [thread:$0]  %s31, 2048, %s33, [#allocation6], 128, 128, 8
    $region9: #{tpu_custom_call.1} parent=1 // pred_fallthru
      _
    // Predicated region
    $region10: #{tpu_custom_call.1} parent=1 // pred_check
      _
    $region11: #{tpu_custom_call.1} parent=1 // pred_check_branch
      %40 = sbr.rel (0) target = $region13
    $region12: #{tpu_custom_call.1} parent=1 // pred_region
      _
    $region13: #{tpu_custom_call.1} parent=1 // pred_fallthru
      _
    // Predicated region
    $region14: #{tpu_custom_call.1} parent=1 // pred_check
      _
    $region15: #{tpu_custom_call.1} parent=1 // pred_check_branch
      %42 = sbr.rel (0) target = $region17
    $region16: #{tpu_custom_call.1} parent=1 // pred_region
      %44 = vsyncadd [#allocation6], 0
      %s45 = sshll.u32 %s3, 4
      %s46 = int_to_ptr.hbm [resolvable:$true] %s45
      %s47 = sshll.u32 [#allocation7], 4
      %s48 = int_to_ptr.vmem [resolvable:$true] %s47
      %53 = dma.hbm_to_vmem [thread:$0]  %s46, 2048, %s48, [#allocation6], 128, 128, 8
    $region17: #{tpu_custom_call.1} parent=1 // pred_fallthru
      _
    // Predicated region
    $region18: #{tpu_custom_call.1} parent=1 // pred_check
      _
    $region19: #{tpu_custom_call.1} parent=1 // pred_check_branch
      %55 = sbr.rel (0) target = $region21
    $region20: #{tpu_custom_call.1} parent=1 // pred_region
      _
    $region21: #{tpu_custom_call.1} parent=1 // pred_fallthru
      _
    // Predicated region
    $region22: #{tpu_custom_call.1} parent=1 // pred_check
      _
    $region23: #{tpu_custom_call.1} parent=1 // pred_check_branch
      %57 = sbr.rel (0) target = $region25
    $region24: #{tpu_custom_call.1} parent=1 // pred_region
      %59 = dma.done [#allocation3], 256
    $region25: #{tpu_custom_call.1} parent=1 // pred_fallthru
      _
    // Predicated region
    $region26: #{tpu_custom_call.1} parent=1 // pred_check
      _
    $region27: #{tpu_custom_call.1} parent=1 // pred_check_branch
      %61 = sbr.rel (0) target = $region29
    $region28: #{tpu_custom_call.1} parent=1 // pred_region
      %63 = dma.done [#allocation6], 2048
    $region29: #{tpu_custom_call.1} parent=1 // pred_fallthru
      _
    // Predicated region
    $region30: #{tpu_custom_call.1} parent=1 // pred_check
      _
    $region31: #{tpu_custom_call.1} parent=1 // pred_check_branch
      %65 = sbr.rel (0) target = $region33
    $region32: #{tpu_custom_call.1} parent=1 // pred_region
      %67 = dma.done [#allocation6], 2048
    $region33: #{tpu_custom_call.1} parent=1 // pred_fallthru
      _
    %v68 = vld [vmem:[#allocation2] sm:$0xff]
    %v69 = vld [vmem:[#allocation2 + $0x8] sm:$0xff]
    %v70 = vld [vmem:[#allocation5] sm:$0xff]
    %v71 = vld [vmem:[#allocation5 + $0x8] sm:$0xff]
    %v72 = vld [vmem:[#allocation5 + $0x10] sm:$0xff]
    %v73 = vld [vmem:[#allocation5 + $0x18] sm:$0xff]
    %v74 = vld [vmem:[#allocation5 + $0x20] sm:$0xff]
    %v75 = vld [vmem:[#allocation5 + $0x28] sm:$0xff]
    %v76 = vld [vmem:[#allocation5 + $0x30] sm:$0xff]
    %v77 = vld [vmem:[#allocation5 + $0x38] sm:$0xff]
    %v78 = vld [vmem:[#allocation5 + $0x40] sm:$0xff]
    %v79 = vld [vmem:[#allocation5 + $0x48] sm:$0xff]
    %v80 = vld [vmem:[#allocation5 + $0x50] sm:$0xff]
    %v81 = vld [vmem:[#allocation5 + $0x58] sm:$0xff]
    %v82 = vld [vmem:[#allocation5 + $0x60] sm:$0xff]
    %v83 = vld [vmem:[#allocation5 + $0x68] sm:$0xff]
    %v84 = vld [vmem:[#allocation5 + $0x70] sm:$0xff]
    %v85 = vld [vmem:[#allocation5 + $0x78] sm:$0xff]
    %v86 = vld [vmem:[%s2] sm:$0x1]
    %v88 = vperm.slane %v86, 0
    %90 = vmatpush.msra.mxu0 %v85
    %91 = vmatpush.msra.mxu0 %v84
    %92 = vmatpush.msra.mxu0 %v83
    %93 = vmatpush.msra.mxu0 %v82
    %94 = vmatpush.msra.mxu0 %v81
    %95 = vmatpush.msra.mxu0 %v80
    %96 = vmatpush.msra.mxu0 %v79
    %97 = vmatpush.msra.mxu0 %v78
    %98 = vmatpush.msra.mxu0 %v77
    %99 = vmatpush.msra.mxu0 %v76
    %100 = vmatpush.msra.mxu0 %v75
    %101 = vmatpush.msra.mxu0 %v74
    %102 = vmatpush.msra.mxu0 %v73
    %103 = vmatpush.msra.mxu0 %v72
    %104 = vmatpush.msra.mxu0 %v71
    %105 = vmatpush.msra.mxu0 %v70
    %106 = vmatmul.f32.gmra.mxu0 %v68
    %v107 = vpop.f32.mrf.mxu0
    %v108 = vadd.f32 %v88, %v107
    %109 = vmatmul.f32.gmra.mxu0 %v69
    %v110 = vpop.f32.mrf.mxu0
    %v111 = vadd.f32 %v88, %v110
    %112 = vdwg.mxu0
    %v113 = vmax.f32 %v108, 0.0
    %v114 = vmax.f32 %v111, 0.0
    %v115 = vld [vmem:[#allocation7] sm:$0xff]
    %v116 = vld [vmem:[#allocation7 + $0x8] sm:$0xff]
    %v117 = vld [vmem:[#allocation7 + $0x10] sm:$0xff]
    %v118 = vld [vmem:[#allocation7 + $0x18] sm:$0xff]
    %v119 = vld [vmem:[#allocation7 + $0x20] sm:$0xff]
    %v120 = vld [vmem:[#allocation7 + $0x28] sm:$0xff]
    %v121 = vld [vmem:[#allocation7 + $0x30] sm:$0xff]
    %v122 = vld [vmem:[#allocation7 + $0x38] sm:$0xff]
    %v123 = vld [vmem:[#allocation7 + $0x40] sm:$0xff]
    %v124 = vld [vmem:[#allocation7 + $0x48] sm:$0xff]
    %v125 = vld [vmem:[#allocation7 + $0x50] sm:$0xff]
    %v126 = vld [vmem:[#allocation7 + $0x58] sm:$0xff]
    %v127 = vld [vmem:[#allocation7 + $0x60] sm:$0xff]
    %v128 = vld [vmem:[#allocation7 + $0x68] sm:$0xff]
    %v129 = vld [vmem:[#allocation7 + $0x70] sm:$0xff]
    %v130 = vld [vmem:[#allocation7 + $0x78] sm:$0xff]
    %v131 = vld [vmem:[%s4] sm:$0x1]
    %v133 = vperm.slane %v131, 0
    %135 = vmatpush.msra.mxu0 %v130
    %136 = vmatpush.msra.mxu0 %v129
    %137 = vmatpush.msra.mxu0 %v128
    %138 = vmatpush.msra.mxu0 %v127
    %139 = vmatpush.msra.mxu0 %v126
    %140 = vmatpush.msra.mxu0 %v125
    %141 = vmatpush.msra.mxu0 %v124
    %142 = vmatpush.msra.mxu0 %v123
    %143 = vmatpush.msra.mxu0 %v122
    %144 = vmatpush.msra.mxu0 %v121
    %145 = vmatpush.msra.mxu0 %v120
    %146 = vmatpush.msra.mxu0 %v119
    %147 = vmatpush.msra.mxu0 %v118
    %148 = vmatpush.msra.mxu0 %v117
    %149 = vmatpush.msra.mxu0 %v116
    %150 = vmatpush.msra.mxu0 %v115
    %151 = vmatmul.f32.gmra.mxu0 %v113
    %v152 = vpop.f32.mrf.mxu0
    %v153 = vadd.f32 %v133, %v152
    %154 = vmatmul.f32.gmra.mxu0 %v114
    %v155 = vpop.f32.mrf.mxu0
    %v156 = vadd.f32 %v133, %v155
    %157 = vdwg.mxu0
    %158 = vst [vmem:[#allocation8] sm:$0xff] %v153
    %159 = vst [vmem:[#allocation8 + $0x8] sm:$0xff] %v156
    // Predicated region
    $region34: #{tpu_custom_call.1} parent=1 // pred_check
      _
    $region35: #{tpu_custom_call.1} parent=1 // pred_check_branch
      %161 = sbr.rel (0) target = $region37
    $region36: #{tpu_custom_call.1} parent=1 // pred_region
      %163 = vsyncadd [#allocation4], 0
      %s164 = sshll.u32 [#allocation8], 4
      %s165 = int_to_ptr.vmem [resolvable:$true] %s164
      %s166 = sshll.u32 %s5, 4
      %s167 = int_to_ptr.hbm [resolvable:$true] %s166
      %172 = dma.vmem_to_hbm [thread:$0]  %s165, 256, %s167, [#allocation4], 128, 128, 8
    $region37: #{tpu_custom_call.1} parent=1 // pred_fallthru
      _
    // Predicated region
    $region38: #{tpu_custom_call.1} parent=1 // pred_check
      _
    $region39: #{tpu_custom_call.1} parent=1 // pred_check_branch
      %174 = sbr.rel (0) target = $region41
    $region40: #{tpu_custom_call.1} parent=1 // pred_region
      %176 = dma.done [#allocation4], 256
    $region41: #{tpu_custom_call.1} parent=1 // pred_fallthru
      _
    %177 = vsyncpa [#allocation3], 1
    %178 = vsyncpa [#allocation6], 1
    %179 = vsyncpa [#allocation4], 1

// kernel: tpu_custom_call.1
$region0: #{tpu_custom_call.1}
  #allocation0 [shape = 'u32[]', space=smem, size = 0x4, offset = 0x4, fixed_abs, tag = 'smem constant byte address 0x4 - core index']
  #allocation1 [shape = 'u32[72,128]{1,0:T(1,128)}', space=vmem, size = 0x9000, scoped, tag = 'internal scratch']
  %s0 = inlined_call_operand.hbm [shape: f32[16,128], index: 0, kind: input, shape index: {}]
  %s1 = inlined_call_operand.hbm [shape: f32[128,128], index: 1, kind: input, shape index: {}]
  %s2 = inlined_call_operand.vmem [shape: f32[1,128], index: 2, kind: input, shape index: {}]
  %s3 = inlined_call_operand.hbm [shape: f32[128,128], index: 3, kind: input, shape index: {}]
  %s4 = inlined_call_operand.vmem [shape: f32[1,128], index: 4, kind: input, shape index: {}]
  %s5 = inlined_call_operand.hbm [shape: f32[16,128], index: 5, kind: output, shape index: {}]
  %s6 = sld [smem:[#allocation0]]
  $region42: #{tpu_custom_call.1} parent=0
    _
  %s8 = ssub.s32 1, %s6
  %s9 = scalar_select 0, %s8, %s6
  $region1: #{tpu_custom_call.1} parent=0
    #allocation2 [shape = 'u8[8192]{0}', space=vmem, size = 0x2000, scoped, tag = 'input window, operand 0, single buffered']
    #allocation3 [shape = 's32[1]{0}', space=sflag, size = 0x4, scoped, tag = 'scoped memory for tpu_custom_call.1']
    #allocation4 [shape = 's32[1]{0}', space=sflag, size = 0x4, scoped, tag = 'scoped memory for tpu_custom_call.1']
    #allocation5 [shape = 'u8[65536]{0}', space=vmem, size = 0x10000, scoped, tag = 'input window, operand 1, single buffered']
    #allocation6 [shape = 's32[1]{0}', space=sflag, size = 0x4, scoped, tag = 'scoped memory for tpu_custom_call.1']
    #allocation7 [shape = 'u8[65536]{0}', space=vmem, size = 0x10000, scoped, tag = 'input window, operand 3, single buffered']
    #allocation8 [shape = 'u8[8192]{0}', space=vmem, size = 0x2000, scoped, tag = 'output window, operand 0, single buffered']
    %10 = vsyncpa [#allocation3], 0
    %11 = vsyncpa [#allocation6], 0
    %12 = vsyncpa [#allocation4], 0
    // Predicated region
    $region2: #{tpu_custom_call.1} parent=1 // pred_check
      _
    $region3: #{tpu_custom_call.1} parent=1 // pred_check_branch
      %14 = sbr.rel (0) target = $region5
    $region4: #{tpu_custom_call.1} parent=1 // pred_region
      %16 = vsyncadd [#allocation3], 0
      %s17 = sshll.u32 %s0, 4
      %s18 = int_to_ptr.hbm [resolvable:$true] %s17
      %s19 = sshll.u32 [#allocation2], 4
      %s20 = int_to_ptr.vmem [resolvable:$true] %s19
      %25 = dma.hbm_to_vmem [thread:$0]  %s18, 256, %s20, [#allocation3], 128, 128, 8
    $region5: #{tpu_custom_call.1} parent=1 // pred_fallthru
      _
    // Predicated region
    $region6: #{tpu_custom_call.1} parent=1 // pred_check
      _
    $region7: #{tpu_custom_call.1} parent=1 // pred_check_branch
      %27 = sbr.rel (0) target = $region9
    $region8: #{tpu_custom_call.1} parent=1 // pred_region
      %29 = vsyncadd [#allocation6], 0
      %s30 = sshll.u32 %s1, 4
      %s31 = int_to_ptr.hbm [resolvable:$true] %s30
      %s32 = sshll.u32 [#allocation5], 4
      %s33 = int_to_ptr.vmem [resolvable:$true] %s32
      %38 = dma.hbm_to_vmem [thread:$0]  %s31, 2048, %s33, [#allocation6], 128, 128, 8
    $region9: #{tpu_custom_call.1} parent=1 // pred_fallthru
      _
    // Predicated region
    $region10: #{tpu_custom_call.1} parent=1 // pred_check
      _
    $region11: #{tpu_custom_call.1} parent=1 // pred_check_branch
      %40 = sbr.rel (0) target = $region13
    $region12: #{tpu_custom_call.1} parent=1 // pred_region
      _
    $region13: #{tpu_custom_call.1} parent=1 // pred_fallthru
      _
    // Predicated region
    $region14: #{tpu_custom_call.1} parent=1 // pred_check
      _
    $region15: #{tpu_custom_call.1} parent=1 // pred_check_branch
      %42 = sbr.rel (0) target = $region17
    $region16: #{tpu_custom_call.1} parent=1 // pred_region
      %44 = vsyncadd [#allocation6], 0
      %s45 = sshll.u32 %s3, 4
      %s46 = int_to_ptr.hbm [resolvable:$true] %s45
      %s47 = sshll.u32 [#allocation7], 4
      %s48 = int_to_ptr.vmem [resolvable:$true] %s47
      %53 = dma.hbm_to_vmem [thread:$0]  %s46, 2048, %s48, [#allocation6], 128, 128, 8
    $region17: #{tpu_custom_call.1} parent=1 // pred_fallthru
      _
    // Predicated region
    $region18: #{tpu_custom_call.1} parent=1 // pred_check
      _
    $region19: #{tpu_custom_call.1} parent=1 // pred_check_branch
      %55 = sbr.rel (0) target = $region21
    $region20: #{tpu_custom_call.1} parent=1 // pred_region
      _
    $region21: #{tpu_custom_call.1} parent=1 // pred_fallthru
      _
    // Predicated region
    $region22: #{tpu_custom_call.1} parent=1 // pred_check
      _
    $region23: #{tpu_custom_call.1} parent=1 // pred_check_branch
      %57 = sbr.rel (0) target = $region25
    $region24: #{tpu_custom_call.1} parent=1 // pred_region
      %59 = dma.done [#allocation3], 256
    $region25: #{tpu_custom_call.1} parent=1 // pred_fallthru
      _
    // Predicated region
    $region26: #{tpu_custom_call.1} parent=1 // pred_check
      _
    $region27: #{tpu_custom_call.1} parent=1 // pred_check_branch
      %61 = sbr.rel (0) target = $region29
    $region28: #{tpu_custom_call.1} parent=1 // pred_region
      %63 = dma.done [#allocation6], 2048
    $region29: #{tpu_custom_call.1} parent=1 // pred_fallthru
      _
    // Predicated region
    $region30: #{tpu_custom_call.1} parent=1 // pred_check
      _
    $region31: #{tpu_custom_call.1} parent=1 // pred_check_branch
      %65 = sbr.rel (0) target = $region33
    $region32: #{tpu_custom_call.1} parent=1 // pred_region
      %67 = dma.done [#allocation6], 2048
    $region33: #{tpu_custom_call.1} parent=1 // pred_fallthru
      _
    %v68 = vld [vmem:[#allocation2] sm:$0xff]
    %v69 = vld [vmem:[#allocation2 + $0x8] sm:$0xff]
    %v70 = vld [vmem:[#allocation5] sm:$0xff]
    %v71 = vld [vmem:[#allocation5 + $0x8] sm:$0xff]
    %v72 = vld [vmem:[#allocation5 + $0x10] sm:$0xff]
    %v73 = vld [vmem:[#allocation5 + $0x18] sm:$0xff]
    %v74 = vld [vmem:[#allocation5 + $0x20] sm:$0xff]
    %v75 = vld [vmem:[#allocation5 + $0x28] sm:$0xff]
    %v76 = vld [vmem:[#allocation5 + $0x30] sm:$0xff]
    %v77 = vld [vmem:[#allocation5 + $0x38] sm:$0xff]
    %v78 = vld [vmem:[#allocation5 + $0x40] sm:$0xff]
    %v79 = vld [vmem:[#allocation5 + $0x48] sm:$0xff]
    %v80 = vld [vmem:[#allocation5 + $0x50] sm:$0xff]
    %v81 = vld [vmem:[#allocation5 + $0x58] sm:$0xff]
    %v82 = vld [vmem:[#allocation5 + $0x60] sm:$0xff]
    %v83 = vld [vmem:[#allocation5 + $0x68] sm:$0xff]
    %v84 = vld [vmem:[#allocation5 + $0x70] sm:$0xff]
    %v85 = vld [vmem:[#allocation5 + $0x78] sm:$0xff]
    %v86 = vld [vmem:[%s2] sm:$0x1]
    %v88 = vperm.slane %v86, 0
    %90 = vmatpush.msra.mxu0 %v85
    %91 = vmatpush.msra.mxu0 %v84
    %92 = vmatpush.msra.mxu0 %v83
    %93 = vmatpush.msra.mxu0 %v82
    %94 = vmatpush.msra.mxu0 %v81
    %95 = vmatpush.msra.mxu0 %v80
    %96 = vmatpush.msra.mxu0 %v79
    %97 = vmatpush.msra.mxu0 %v78
    %98 = vmatpush.msra.mxu0 %v77
    %99 = vmatpush.msra.mxu0 %v76
    %100 = vmatpush.msra.mxu0 %v75
    %101 = vmatpush.msra.mxu0 %v74
    %102 = vmatpush.msra.mxu0 %v73
    %103 = vmatpush.msra.mxu0 %v72
    %104 = vmatpush.msra.mxu0 %v71
    %105 = vmatpush.msra.mxu0 %v70
    %106 = vmatmul.f32.gmra.mxu0 %v68
    %v107 = vpop.f32.mrf.mxu0
    %v108 = vadd.f32 %v88, %v107
    %109 = vmatmul.f32.gmra.mxu0 %v69
    %v110 = vpop.f32.mrf.mxu0
    %v111 = vadd.f32 %v88, %v110
    %112 = vdwg.mxu0
    %v113 = vmax.f32 %v108, 0.0
    %v114 = vmax.f32 %v111, 0.0
    %v115 = vld [vmem:[#allocation7] sm:$0xff]
    %v116 = vld [vmem:[#allocation7 + $0x8] sm:$0xff]
    %v117 = vld [vmem:[#allocation7 + $0x10] sm:$0xff]
    %v118 = vld [vmem:[#allocation7 + $0x18] sm:$0xff]
    %v119 = vld [vmem:[#allocation7 + $0x20] sm:$0xff]
    %v120 = vld [vmem:[#allocation7 + $0x28] sm:$0xff]
    %v121 = vld [vmem:[#allocation7 + $0x30] sm:$0xff]
    %v122 = vld [vmem:[#allocation7 + $0x38] sm:$0xff]
    %v123 = vld [vmem:[#allocation7 + $0x40] sm:$0xff]
    %v124 = vld [vmem:[#allocation7 + $0x48] sm:$0xff]
    %v125 = vld [vmem:[#allocation7 + $0x50] sm:$0xff]
    %v126 = vld [vmem:[#allocation7 + $0x58] sm:$0xff]
    %v127 = vld [vmem:[#allocation7 + $0x60] sm:$0xff]
    %v128 = vld [vmem:[#allocation7 + $0x68] sm:$0xff]
    %v129 = vld [vmem:[#allocation7 + $0x70] sm:$0xff]
    %v130 = vld [vmem:[#allocation7 + $0x78] sm:$0xff]
    %v131 = vld [vmem:[%s4] sm:$0x1]
    %v133 = vperm.slane %v131, 0
    %135 = vmatpush.msra.mxu0 %v130
    %136 = vmatpush.msra.mxu0 %v129
    %137 = vmatpush.msra.mxu0 %v128
    %138 = vmatpush.msra.mxu0 %v127
    %139 = vmatpush.msra.mxu0 %v126
    %140 = vmatpush.msra.mxu0 %v125
    %141 = vmatpush.msra.mxu0 %v124
    %142 = vmatpush.msra.mxu0 %v123
    %143 = vmatpush.msra.mxu0 %v122
    %144 = vmatpush.msra.mxu0 %v121
    %145 = vmatpush.msra.mxu0 %v120
    %146 = vmatpush.msra.mxu0 %v119
    %147 = vmatpush.msra.mxu0 %v118
    %148 = vmatpush.msra.mxu0 %v117
    %149 = vmatpush.msra.mxu0 %v116
    %150 = vmatpush.msra.mxu0 %v115
    %151 = vmatmul.f32.gmra.mxu0 %v113
    %v152 = vpop.f32.mrf.mxu0
    %v153 = vadd.f32 %v133, %v152
    %154 = vmatmul.f32.gmra.mxu0 %v114
    %v155 = vpop.f32.mrf.mxu0
    %v156 = vadd.f32 %v133, %v155
    %157 = vdwg.mxu0
    %158 = vst [vmem:[#allocation8] sm:$0xff] %v153
    %159 = vst [vmem:[#allocation8 + $0x8] sm:$0xff] %v156
    // Predicated region
    $region34: #{tpu_custom_call.1} parent=1 // pred_check
      _
    $region35: #{tpu_custom_call.1} parent=1 // pred_check_branch
      %161 = sbr.rel (0) target = $region37
    $region36: #{tpu_custom_call.1} parent=1 // pred_region
      %163 = vsyncadd [#allocation4], 0
      %s164 = sshll.u32 [#allocation8], 4
      %s165 = int_to_ptr.vmem [resolvable:$true] %s164
      %s166 = sshll.u32 %s5, 4
      %s167 = int_to_ptr.hbm [resolvable:$true] %s166
      %172 = dma.vmem_to_hbm [thread:$0]  %s165, 256, %s167, [#allocation4], 128, 128, 8
    $region37: #{tpu_custom_call.1} parent=1 // pred_fallthru
      _
    // Predicated region
    $region38: #{tpu_custom_call.1} parent=1 // pred_check
      _
    $region39: #{tpu_custom_call.1} parent=1 // pred_check_branch
      %174 = sbr.rel (0) target = $region41
    $region40: #{tpu_custom_call.1} parent=1 // pred_region
      %176 = dma.done [#allocation4], 256
    $region41: #{tpu_custom_call.1} parent=1 // pred_fallthru
      _
    %177 = vsyncpa [#allocation3], 1
    %178 = vsyncpa [#allocation6], 1
    %179 = vsyncpa [#allocation4], 1

</llo_original>
